<compile_context>
chip_gen: v7x
topology: tpu7x:2x2x1
jax: 0.10.0
libtpu: 0.0.40
codegen_flags: <defaults>
</compile_context>

<pallas_src>
import functools

import jax
import jax.numpy as jnp
from jax.experimental import pallas as pl
from jax.experimental.pallas import tpu as pltpu


def _focal_kernel(logits_ref, tgt_ref, out_ref, *, gamma, s_total, ts,
                  needs_mask):
    """One grid step: fully-reduced focal-loss partial sum for a (C, ts) tile."""

    def tile_partial(x, tgt, valid):
        # x: (C, TS) f32, tgt: (1, TS) i32, valid: (1, TS) bool or None.
        # Numerically-stable softmax pieces over the class (sublane) axis.
        m = jnp.max(x, axis=0, keepdims=True)                     # (1, TS)
        e = jnp.exp(x - m)                                        # (C, TS) EUP
        sum_e = jnp.sum(e, axis=0, keepdims=True)                 # (1, TS)
        lse = m + jnp.log(sum_e)                                  # (1, TS)

        # Target-class pick via a one-hot built from a sublane iota.
        class_ids = jax.lax.broadcasted_iota(jnp.int32, x.shape, 0)
        onehot = (class_ids == tgt).astype(jnp.float32)           # (C, TS)
        tgt_logit = jnp.sum(x * onehot, axis=0, keepdims=True)    # (1, TS)
        tgt_e = jnp.sum(e * onehot, axis=0, keepdims=True)        # (1, TS)

        ce = lse - tgt_logit                                      # (1, TS)
        # pt = exp(-ce); reuse exp(x - m) instead of a second EUP exp:
        # exp(-ce) == exp(tgt_logit - lse) == tgt_e / sum_e.
        pt = tgt_e * pl.reciprocal(sum_e, approx=False)
        # Clamp to keep pow(negative, float) well defined (rounding only).
        w = jnp.maximum(1.0 - pt, 0.0)

        g = float(gamma)
        if g == int(g) and 0 <= int(g) <= 8:
            # Integer gamma: repeated multiply (no log/exp on the EUP).
            wg = jnp.ones_like(w)
            for _ in range(int(g)):
                wg = wg * w
        else:
            wg = w ** g
        focal = wg * ce                                           # (1, TS)
        if valid is not None:
            focal = jnp.where(valid, focal, 0.0)
        # One cross-lane reduce per step (XLU slot, otherwise idle).
        return jnp.sum(focal, axis=1, keepdims=True)              # (1, 1)

    x_raw = logits_ref[...].astype(jnp.float32)   # (C, TS)
    tgt_raw = tgt_ref[...]                        # (1, TS) int32

    if needs_mask:
        s = pl.program_id(1)
        ns = pl.num_programs(1)

        @pl.when(s == ns - 1)
        def _():
            # Spatial tail: mask out-of-bounds lanes (no wrapper-side padding).
            lane = jax.lax.broadcasted_iota(jnp.int32, (1, ts), 1) + s * ts
            valid = lane < s_total
            x = jnp.where(valid, x_raw, 0.0)
            tgt = jnp.where(valid, tgt_raw, 0)
            out_ref[...] = tile_partial(x, tgt, valid)

        @pl.when(s != ns - 1)
        def _():
            out_ref[...] = tile_partial(x_raw, tgt_raw, None)
    else:
        out_ref[...] = tile_partial(x_raw, tgt_raw, None)


def focal_loss(logits, targets, gamma=2.0,
               vmem_budget_bytes=28 * 1024 * 1024):
    """Matches FocalLoss(gamma, alpha=None, ignore_index=None).forward."""
    # Mirror the PyTorch squeeze of a singleton channel axis on 5-D targets.
    if targets.ndim == 5 and targets.shape[1] == 1:
        targets = targets[:, 0]
    # TODO(synk): alpha class-weights / ignore_index are not implemented
    # (module defaults are None, so forward semantics are unchanged).

    if not jnp.issubdtype(logits.dtype, jnp.floating):
        logits = logits.astype(jnp.float32)

    B, C = logits.shape[0], logits.shape[1]
    S = 1
    for d in logits.shape[2:]:
        S *= d

    # Free reshapes only (no transpose, no pad): classes stay contiguous on
    # the sublane axis, flattened spatial goes to lanes.  bf16 logits are
    # DMA'd as bf16 and upcast inside the kernel.
    x = logits.reshape(B, C, S)
    t = targets.reshape(B, 1, S).astype(jnp.int32)

    # Tile size: budget against the *sublane-padded, double-buffered* VMEM
    # footprint so it fits v7x (64 MiB/TC) as well as v5e/v6e (128 MiB).
    itemsize = jnp.dtype(x.dtype).itemsize
    pad_c = pl.cdiv(C, 8) * 8
    bytes_per_lane = 2 * pad_c * itemsize + 2 * 8 * 4   # logits + int32 tgt
    ts = (vmem_budget_bytes // bytes_per_lane) // 128 * 128
    ts = max(128, ts)
    ts = min(ts, pl.cdiv(S, 128) * 128)
    ns = pl.cdiv(S, ts)
    needs_mask = (S % ts) != 0

    kernel = functools.partial(
        _focal_kernel, gamma=float(gamma), s_total=S, ts=ts,
        needs_mask=needs_mask)

    # Every grid step writes an independent (1,1) partial -> no cross-step
    # dependency, both axes "parallel" (megacore on v7x, no-op on v5e/v6e).
    partials = pl.pallas_call(
        kernel,
        out_shape=jax.ShapeDtypeStruct((B, ns, 1, 1), jnp.float32),
        grid_spec=pltpu.PrefetchScalarGridSpec(
            num_scalar_prefetch=0,
            grid=(B, ns),
            in_specs=[
                pl.BlockSpec((None, C, ts), lambda b, s: (b, 0, s)),
                pl.BlockSpec((None, 1, ts), lambda b, s: (b, 0, s)),
            ],
            out_specs=pl.BlockSpec((None, None, 1, 1),
                                   lambda b, s: (b, s, 0, 0)),
        ),
        compiler_params=pltpu.CompilerParams(
            dimension_semantics=("parallel", "parallel"),
            vmem_limit_bytes=40 * 1024 * 1024,
        ),
    )(x, t)

    # Tiny final reduce + mean scaling in XLA.
    return jnp.sum(partials) / float(B * S)


def _focal_loss_ref(logits, targets, gamma=2.0):
    if targets.ndim == 5 and targets.shape[1] == 1:
        targets = targets[:, 0]
    C = logits.shape[1]
    x = jnp.moveaxis(logits, 1, -1).reshape(-1, C).astype(jnp.float32)
    t = targets.reshape(-1).astype(jnp.int32)
    lse = jax.nn.logsumexp(x, axis=-1)
    ce = lse - jnp.take_along_axis(x, t[:, None], axis=-1)[:, 0]
    pt = jnp.exp(-ce)
    return jnp.mean((1.0 - pt) ** gamma * ce)


if __name__ == "__main__":
    key = jax.random.PRNGKey(0)
    k1, k2 = jax.random.split(key)
    B, C, H, W = 2, 4, 16, 16
    logits = jax.random.normal(k1, (B, C, H, W), dtype=jnp.float32)
    targets = jax.random.randint(k2, (B, H, W), 0, C, dtype=jnp.int32)

    loss = focal_loss(logits, targets, gamma=2.0)
    loss = jax.block_until_ready(loss)

    ref = _focal_loss_ref(logits, targets, gamma=2.0)
    assert jnp.allclose(loss, ref, rtol=1e-5, atol=1e-6), (loss, ref)
    print("KERNEL_OK")
</pallas_src>

<mosaic_0001>
module attributes {stable_mosaic.version = 11 : i64} {
  func.func @_focal_kernel(%arg0: i32, %arg1: i32, %arg2: memref<1x4x256xf32, #tpu.memory_space<vmem>>, %arg3: memref<1x1x256xi32, #tpu.memory_space<vmem>>, %arg4: memref<1x1x1x1xf32, #tpu.memory_space<vmem>>) attributes {dimension_semantics = [#tpu.dimension_semantics<parallel>, #tpu.dimension_semantics<parallel>], iteration_bounds = array<i64: 2, 1>, scalar_prefetch = 0 : i64, scratch_operands = 0 : i64, tpu.core_type = #tpu.core_type<tc>, window_params = [{transform_indices = @transform_0, window_bounds = array<i64: 1, 4, 256>}, {transform_indices = @transform_1, window_bounds = array<i64: 1, 1, 256>}, {transform_indices = @transform_2, window_bounds = array<i64: 1, 1, 1, 1>}]} {
    %c0 = arith.constant 0 : index
    %c0_0 = arith.constant 0 : index
    %c0_1 = arith.constant 0 : index
    %0 = vector.load %arg2[%c0, %c0_0, %c0_1] : memref<1x4x256xf32, #tpu.memory_space<vmem>>, vector<1x4x256xf32>
    %1 = vector.shape_cast %0 : vector<1x4x256xf32> to vector<4x256xf32>
    %c0_2 = arith.constant 0 : index
    %c0_3 = arith.constant 0 : index
    %c0_4 = arith.constant 0 : index
    %2 = vector.load %arg3[%c0_2, %c0_3, %c0_4] : memref<1x1x256xi32, #tpu.memory_space<vmem>>, vector<1x1x256xi32>
    %3 = vector.shape_cast %2 : vector<1x1x256xi32> to vector<1x256xi32>
    %cst = arith.constant dense<0xFF800000> : vector<256xf32>
    %4 = vector.multi_reduction <maximumf>, %1, %cst [0] : vector<4x256xf32> to vector<256xf32>
    %5 = vector.shape_cast %4 : vector<256xf32> to vector<1x256xf32>
    %6 = vector.broadcast %5 : vector<1x256xf32> to vector<4x256xf32>
    %7 = arith.subf %1, %6 : vector<4x256xf32>
    %8 = math.exp %7 : vector<4x256xf32>
    %cst_5 = arith.constant dense<0.000000e+00> : vector<256xf32>
    %9 = vector.multi_reduction <add>, %8, %cst_5 [0] : vector<4x256xf32> to vector<256xf32>
    %10 = vector.shape_cast %9 : vector<256xf32> to vector<1x256xf32>
    %11 = math.log %10 : vector<1x256xf32>
    %12 = arith.addf %5, %11 : vector<1x256xf32>
    %13 = tpu.iota {dimensions = array<i32: 0>} : vector<4x256xi32>
    %14 = vector.broadcast %3 : vector<1x256xi32> to vector<4x256xi32>
    %15 = arith.cmpi eq, %13, %14 : vector<4x256xi32>
    %16 = arith.extui %15 : vector<4x256xi1> to vector<4x256xi32>
    %17 = arith.sitofp %16 : vector<4x256xi32> to vector<4x256xf32>
    %18 = arith.mulf %1, %17 : vector<4x256xf32>
    %cst_6 = arith.constant dense<0.000000e+00> : vector<256xf32>
    %19 = vector.multi_reduction <add>, %18, %cst_6 [0] : vector<4x256xf32> to vector<256xf32>
    %20 = vector.shape_cast %19 : vector<256xf32> to vector<1x256xf32>
    %21 = arith.mulf %8, %17 : vector<4x256xf32>
    %cst_7 = arith.constant dense<0.000000e+00> : vector<256xf32>
    %22 = vector.multi_reduction <add>, %21, %cst_7 [0] : vector<4x256xf32> to vector<256xf32>
    %23 = vector.shape_cast %22 : vector<256xf32> to vector<1x256xf32>
    %24 = arith.subf %12, %20 : vector<1x256xf32>
    %25 = tpu.reciprocal %10 : vector<1x256xf32> -> vector<1x256xf32>
    %26 = arith.mulf %23, %25 : vector<1x256xf32>
    %cst_8 = arith.constant 1.000000e+00 : f32
    %27 = vector.broadcast %cst_8 : f32 to vector<1x256xf32>
    %28 = arith.subf %27, %26 : vector<1x256xf32>
    %cst_9 = arith.constant 0.000000e+00 : f32
    %29 = vector.broadcast %cst_9 : f32 to vector<1x256xf32>
    %30 = arith.maximumf %28, %29 : vector<1x256xf32>
    %cst_10 = arith.constant 1.000000e+00 : f32
    %31 = vector.broadcast %cst_10 : f32 to vector<1x256xf32>
    %32 = arith.mulf %31, %30 : vector<1x256xf32>
    %33 = arith.mulf %32, %30 : vector<1x256xf32>
    %34 = arith.mulf %33, %24 : vector<1x256xf32>
    %cst_11 = arith.constant dense<0.000000e+00> : vector<1xf32>
    %35 = vector.multi_reduction <add>, %34, %cst_11 [1] : vector<1x256xf32> to vector<1xf32>
    %36 = vector.shape_cast %35 : vector<1xf32> to vector<1x1xf32>
    %c0_12 = arith.constant 0 : index
    %c0_13 = arith.constant 0 : index
    %c0_14 = arith.constant 0 : index
    %c0_15 = arith.constant 0 : index
    %37 = vector.load %arg4[%c0_12, %c0_13, %c0_14, %c0_15] : memref<1x1x1x1xf32, #tpu.memory_space<vmem>>, vector<1x1x1x1xf32>
    %38 = vector.shape_cast %37 : vector<1x1x1x1xf32> to vector<1x1xf32>
    %39 = vector.shape_cast %36 : vector<1x1xf32> to vector<1x1x1x1xf32>
    tpu.vector_store %arg4[%c0_12, %c0_13, %c0_14, %c0_15], %39 {strides = array<i32>} : memref<1x1x1x1xf32, #tpu.memory_space<vmem>>, vector<1x1x1x1xf32>,
    return
  }
  func.func @transform_0(%arg0: i32, %arg1: i32) -> (i32, i32, i32) {
    %c0_i32 = arith.constant 0 : i32
    %c0_i32_0 = arith.constant 0 : i32
    return %arg0, %c0_i32, %arg1 : i32, i32, i32
  }
  func.func @transform_1(%arg0: i32, %arg1: i32) -> (i32, i32, i32) {
    %c0_i32 = arith.constant 0 : i32
    %c0_i32_0 = arith.constant 0 : i32
    return %arg0, %c0_i32, %arg1 : i32, i32, i32
  }
  func.func @transform_2(%arg0: i32, %arg1: i32) -> (i32, i32, i32, i32) {
    %c0_i32 = arith.constant 0 : i32
    %c0_i32_0 = arith.constant 0 : i32
    %c0_i32_1 = arith.constant 0 : i32
    return %arg0, %arg1, %c0_i32, %c0_i32_0 : i32, i32, i32, i32
  }
}

</mosaic_0001>

<llo_original>
// kernel: tpu_custom_call.1
$region0: #{tpu_custom_call.1}
  #allocation0 [shape = 'u32[]', space=smem, size = 0x4, offset = 0x4, fixed_abs, tag = 'smem constant byte address 0x4 - core index']
  #allocation1 [shape = 'u32[144,128]{1,0:T(1,128)}', space=vmem, size = 0x12000, scoped, tag = 'internal scratch']
  %s0 = inlined_call_operand.hbm [shape: f32[2,4,256], index: 0, kind: input, shape index: {}]
  %s1 = inlined_call_operand.hbm [shape: s32[2,1,256], index: 1, kind: input, shape index: {}]
  %s2 = inlined_call_operand.vmem [shape: f32[2,1,1,1], index: 2, kind: output, shape index: {}]
  %s3 = sld [smem:[#allocation0]]
  $region49: #{tpu_custom_call.1} parent=0
    _
  %s5 = ssub.s32 1, %s3
  %s6 = scalar_select 0, %s5, %s3
  $region1: #{tpu_custom_call.1} parent=0
    #allocation2 [shape = 'u8[8192]{0}', space=vmem, size = 0x2000, scoped, tag = 'input window, operand 0']
    #allocation3 [shape = 's32[2]{0}', space=sflag, size = 0x8, scoped, tag = 'scoped memory for tpu_custom_call.1']
    #allocation4 [shape = 'u8[2048]{0}', space=vmem, size = 0x800, scoped, tag = 'input window, operand 1']
    #allocation5 [shape = 's32[2]{0}', space=sflag, size = 0x8, scoped, tag = 'scoped memory for tpu_custom_call.1']
    %7 = vsyncpa [#allocation3], 0
    %s8 = scalar_lea.sflag [#allocation3], 1
    %9 = vsyncpa %s8, 0
    %10 = vsyncpa [#allocation5], 0
    %s11 = scalar_lea.sflag [#allocation5], 1
    %12 = vsyncpa %s11, 0
    loop: start=0, step=1, limit=4
    $region2: #{tpu_custom_call.1} parent=1 // loop_pre_header
      _
    $region3: #{tpu_custom_call.1} parent=1 // loop_header
      %s14 = sphi 0, %s18
      %p15 = scmp.ge.s32.totalorder %s14, 4
      %s21 = sphi 0, %s33
      %s22 = sphi 0, %s29
      %s23 = sphi 0, %s21
      %s24 = sphi 0, %s22
      %s25 = sphi 0, %s23
      %s26 = sphi 0, %s24
      %s38 = sphi 0, %s40
      %s41 = sphi 0, %s38
      %s42 = sphi 0, %s41
      %s58 = sphi 0, %s42
      %s66 = sphi 0, %s68
      %s69 = sphi 0, %s66
      %s70 = sphi 0, %s69
      %s86 = sphi 0, %s70
      %s94 = sphi 0, %s96
      %s97 = sphi 0, %s94
      %s98 = sphi 0, %s97
      %s114 = sphi 0, %s98
    $region4: #{tpu_custom_call.1} parent=1 // loop_header_branch
      %17 = sbr.rel (%p15) target = $region8
    $region5: #{tpu_custom_call.1} parent=1 // loop_body
      %s19 = ssub.s32 %s14, 1
      %s20 = ssub.s32 %s14, 2
      %s27 = sadd.s32 1, %s22
      %p28 = scmp.ge.s32.totalorder %s27, 1
      %s29 = scalar_select %p28, 0, %s27
      %s30 = sadd.s32 1, %s21
      %s31 = scalar_select %p28, %s30, %s21
      %p32 = scmp.ge.s32.totalorder %s31, 2
      %s33 = scalar_select %p32, 0, %s31
      %s34 = ssub.s32 %s21, %s33
      %s35 = ssub.s32 %s22, %s29
      %s36 = sor.u32 %s34, %s35
      %p37 = scmp.eq.s32.totalorder %s36, 0
      %s39 = sadd.s32 %s38, 1
      %s40 = scalar_select %p37, %s38, %s39
      %p43 = pneg %p37
      %p44 = scmp.eq.s32.totalorder %s14, 1
      %p45 = por %p43, %p44
      %p46 = scmp.ne.s32.totalorder %s38, %s41
      %p47 = scmp.eq.s32.totalorder %s14, 0
      %p48 = por %p46, %p47
      %p49 = scmp.ne.s32.totalorder %s38, %s41
      %p50 = scmp.eq.s32.totalorder %s19, 1
      %p51 = por %p49, %p50
      %p52 = scmp.ne.s32.totalorder %s41, %s42
      %p53 = scmp.eq.s32.totalorder %s19, 0
      %p54 = por %p52, %p53
      %p55 = scmp.ne.s32.totalorder %s41, %s42
      %p56 = scmp.eq.s32.totalorder %s20, 1
      %p57 = por %p55, %p56
      %p59 = scmp.ne.s32.totalorder %s42, %s58
      %p60 = scmp.eq.s32.totalorder %s20, 0
      %p61 = por %p59, %p60
      %s62 = ssub.s32 %s21, %s33
      %s63 = ssub.s32 %s22, %s29
      %s64 = sor.u32 %s62, %s63
      %p65 = scmp.eq.s32.totalorder %s64, 0
      %s67 = sadd.s32 %s66, 1
      %s68 = scalar_select %p65, %s66, %s67
      %p71 = pneg %p65
      %p72 = scmp.eq.s32.totalorder %s14, 1
      %p73 = por %p71, %p72
      %p74 = scmp.ne.s32.totalorder %s66, %s69
      %p75 = scmp.eq.s32.totalorder %s14, 0
      %p76 = por %p74, %p75
      %p77 = scmp.ne.s32.totalorder %s66, %s69
      %p78 = scmp.eq.s32.totalorder %s19, 1
      %p79 = por %p77, %p78
      %p80 = scmp.ne.s32.totalorder %s69, %s70
      %p81 = scmp.eq.s32.totalorder %s19, 0
      %p82 = por %p80, %p81
      %p83 = scmp.ne.s32.totalorder %s69, %s70
      %p84 = scmp.eq.s32.totalorder %s20, 1
      %p85 = por %p83, %p84
      %p87 = scmp.ne.s32.totalorder %s70, %s86
      %p88 = scmp.eq.s32.totalorder %s20, 0
      %p89 = por %p87, %p88
      %s90 = ssub.s32 %s21, %s33
      %s91 = ssub.s32 %s22, %s29
      %s92 = sor.u32 %s90, %s91
      %p93 = scmp.eq.s32.totalorder %s92, 0
      %s95 = sadd.s32 %s94, 1
      %s96 = scalar_select %p93, %s94, %s95
      %p99 = pneg %p93
      %p100 = scmp.eq.s32.totalorder %s14, 1
      %p101 = por %p99, %p100
      %p102 = scmp.ne.s32.totalorder %s94, %s97
      %p103 = scmp.eq.s32.totalorder %s14, 0
      %p104 = por %p102, %p103
      %p105 = scmp.ne.s32.totalorder %s94, %s97
      %p106 = scmp.eq.s32.totalorder %s19, 1
      %p107 = por %p105, %p106
      %p108 = scmp.ne.s32.totalorder %s97, %s98
      %p109 = scmp.eq.s32.totalorder %s19, 0
      %p110 = por %p108, %p109
      %p111 = scmp.ne.s32.totalorder %s97, %s98
      %p112 = scmp.eq.s32.totalorder %s20, 1
      %p113 = por %p111, %p112
      %p115 = scmp.ne.s32.totalorder %s98, %s114
      %p116 = scmp.eq.s32.totalorder %s20, 0
      %p117 = por %p115, %p116
      %p118 = scmp.le.s32.totalorder 1, %s14
      %p119 = scmp.lt.s32.totalorder %s14, 3
      %p120 = pnand %p118, %p119
      %p121 = pneg %p120
      // Predicated region
      $region9: #{tpu_custom_call.1} parent=5 // pred_check
        _
      $region10: #{tpu_custom_call.1} parent=5 // pred_check_branch
        %123 = sbr.rel (%p120) target = $region12
      $region11: #{tpu_custom_call.1} parent=5 // pred_region
        %s124 = ssub.s32 %s14, 1
      $region12: #{tpu_custom_call.1} parent=5 // pred_fallthru
        _
      %p125 = scmp.lt.s32.totalorder %s14, 2
      // Predicated region
      $region13: #{tpu_custom_call.1} parent=5 // pred_check
        %p126 = pneg %p125
      $region14: #{tpu_custom_call.1} parent=5 // pred_check_branch
        %128 = sbr.rel (%p126) target = $region16
      $region15: #{tpu_custom_call.1} parent=5 // pred_region
        // Predicated region
        $region17: #{tpu_custom_call.1} parent=15 // pred_check
          %p129 = pneg %p48
        $region18: #{tpu_custom_call.1} parent=15 // pred_check_branch
          %131 = sbr.rel (%p129) target = $region20
        $region19: #{tpu_custom_call.1} parent=15 // pred_region
          %s132 = sand.u32 %s38, 1
          %s133 = scalar_lea.sflag [#allocation3], %s132
          %s134 = sand.u32 %s38, 1
          %s135 = smul.addr %s134, 8
          %s136 = scalar_lea.vmem [#allocation2], %s135
          %s137 = smul.u32 2, %s22
          %s139 = ssub.s32 128, 128
          %140 = vsyncadd %s133, %s139
          %s141 = smul.addr %s21, 2
          %s142 = sadd.s32 %s137, %s141
          %s143 = smul.addr %s142, 64
          %s144 = scalar_lea.hbm %s0, %s143
          %s146 = sshll.u32 %s136, 4
          %s147 = int_to_ptr.vmem [resolvable:$true] %s146
          %149 = dma.hbm_to_vmem [thread:$0]  %s144, 128, %s147, %s133
        $region20: #{tpu_custom_call.1} parent=15 // pred_fallthru
          _
        // Predicated region
        $region21: #{tpu_custom_call.1} parent=15 // pred_check
          %p150 = pneg %p76
        $region22: #{tpu_custom_call.1} parent=15 // pred_check_branch
          %152 = sbr.rel (%p150) target = $region24
        $region23: #{tpu_custom_call.1} parent=15 // pred_region
          %s153 = sand.u32 %s66, 1
          %s154 = scalar_lea.sflag [#allocation5], %s153
          %s155 = sand.u32 %s66, 1
          %s156 = smul.addr %s155, 2
          %s157 = scalar_lea.vmem [#allocation4], %s156
          %s158 = smul.u32 2, %s22
          %s160 = ssub.s32 32, 32
          %161 = vsyncadd %s154, %s160
          %s162 = smul.addr %s21, 2
          %s163 = sadd.s32 %s158, %s162
          %s164 = smul.addr %s163, 16
          %s165 = scalar_lea.hbm %s1, %s164
          %s167 = sshll.u32 %s157, 4
          %s168 = int_to_ptr.vmem [resolvable:$true] %s167
          %170 = dma.hbm_to_vmem [thread:$0]  %s165, 32, %s168, %s154
        $region24: #{tpu_custom_call.1} parent=15 // pred_fallthru
          _
      $region16: #{tpu_custom_call.1} parent=5 // pred_fallthru
        _
      %p171 = scmp.le.s32.totalorder 1, %s14
      %p172 = scmp.lt.s32.totalorder %s14, 3
      %p173 = pnand %p171, %p172
      %p174 = pneg %p173
      // Predicated region
      $region25: #{tpu_custom_call.1} parent=5 // pred_check
        _
      $region26: #{tpu_custom_call.1} parent=5 // pred_check_branch
        %176 = sbr.rel (%p173) target = $region28
      $region27: #{tpu_custom_call.1} parent=5 // pred_region
        %s177 = ssub.s32 %s14, 1
        %s178 = sand.u32 %s41, 1
        %s179 = scalar_lea.sflag [#allocation3], %s178
        %s180 = sand.u32 %s41, 1
        %s181 = smul.addr %s180, 8
        %s182 = scalar_lea.vmem [#allocation2], %s181
        // Predicated region
        $region29: #{tpu_custom_call.1} parent=27 // pred_check
          %p183 = pneg %p54
        $region30: #{tpu_custom_call.1} parent=27 // pred_check_branch
          %185 = sbr.rel (%p183) target = $region32
        $region31: #{tpu_custom_call.1} parent=27 // pred_region
          %186 = dma.done %s179, 128
        $region32: #{tpu_custom_call.1} parent=27 // pred_fallthru
          _
        %s187 = sand.u32 %s69, 1
        %s188 = scalar_lea.sflag [#allocation5], %s187
        %s189 = sand.u32 %s69, 1
        %s190 = smul.addr %s189, 2
        %s191 = scalar_lea.vmem [#allocation4], %s190
        // Predicated region
        $region33: #{tpu_custom_call.1} parent=27 // pred_check
          %p192 = pneg %p82
        $region34: #{tpu_custom_call.1} parent=27 // pred_check_branch
          %194 = sbr.rel (%p192) target = $region36
        $region35: #{tpu_custom_call.1} parent=27 // pred_region
          %195 = dma.done %s188, 32
        $region36: #{tpu_custom_call.1} parent=27 // pred_fallthru
          _
        %s196 = sand.u32 %s41, 1
        %s197 = scalar_lea.sflag [#allocation3], %s196
        %s198 = sand.u32 %s41, 1
        %s199 = smul.addr %s198, 8
        %s200 = scalar_lea.vmem [#allocation2], %s199
        %p201 = pneg %p54
        %p202 = pneg %p51
        %s203 = sand.u32 %s69, 1
        %s204 = scalar_lea.sflag [#allocation5], %s203
        %s205 = sand.u32 %s69, 1
        %s206 = smul.addr %s205, 2
        %s207 = scalar_lea.vmem [#allocation4], %s206
        %p208 = pneg %p82
        %p209 = pneg %p79
        %p210 = pneg %p110
        %p211 = pneg %p107
        %p212 = scmp.lt.s32.totalorder %s23, 1
        %s213 = scalar_select %p212, %s23, 1
        %p214 = scmp.lt.s32.totalorder %s24, 0
        %s215 = scalar_select %p214, %s24, 0
        %s216 = sadd.s32 %s215, %s213
        %s217 = scalar_lea.vmem %s2, %s216
        %s218 = smul.u32 2, %s24
        %s219 = smul.u32 2, %s24
        %p220 = scmp.lt.s32.totalorder %s23, 1
        %s221 = scalar_select %p220, %s23, 1
        %p222 = scmp.lt.s32.totalorder %s24, 0
        %s223 = scalar_select %p222, %s24, 0
        %s224 = sadd.s32 %s223, %s221
        %s225 = scalar_lea.vmem %s2, %s224
        %v226 = vld [vmem:[%s182] sm:$0xff]
        %v227 = vld [vmem:[%s191] sm:$0x3]
        %v229 = vcombine.high %v226, %v226
        %vm231 = vcmask 1043456
        %v232 = vsel %vm231, %v226, -inf
        %v233 = vrot.slane %v232, 4
        %v234 = vmax.f32 %v232, %v233
        %v235 = vrot.slane %v234, 2
        %v236 = vmax.f32 %v234, %v235
        %v237 = vrot.slane %v236, 1
        %v238 = vmax.f32 %v236, %v237
        %v239 = vsel %vm231, %v229, -inf
        %v240 = vrot.slane %v239, 4
        %v241 = vmax.f32 %v239, %v240
        %v242 = vrot.slane %v241, 2
        %v243 = vmax.f32 %v241, %v242
        %v244 = vrot.slane %v243, 1
        %v245 = vmax.f32 %v243, %v244
        %v248 = vcombine.low %v238, %v245
        %v250 = vsub.f32 %v226, %v248
        %v251 = vmul.f32 %v250, 1.442695
        %v252 = vpow.pop %v251
        %v254 = vcombine.high %v252, %v252
        %v256 = vsel %vm231, %v252, 0.0
        %v257 = vrot.slane %v256, 4
        %v258 = vadd.f32 %v256, %v257
        %v259 = vrot.slane %v258, 2
        %v260 = vadd.f32 %v258, %v259
        %v261 = vrot.slane %v260, 1
        %v262 = vadd.f32 %v260, %v261
        %v263 = vsel %vm231, %v254, 0.0
        %v264 = vrot.slane %v263, 4
        %v265 = vadd.f32 %v263, %v264
        %v266 = vrot.slane %v265, 2
        %v267 = vadd.f32 %v265, %v266
        %v268 = vrot.slane %v267, 1
        %v269 = vadd.f32 %v267, %v268
        %v270 = vlog2.pop %v262
        %v271 = vmul.f32 %v270, 0.6931472
        %v272 = vlog2.pop %v269
        %v273 = vmul.f32 %v272, 0.6931472
        %v274 = vadd.f32 %v238, %v271
        %v275 = vadd.f32 %v245, %v273
        %v276 = vlaneseq
        %v277 = vshrl.u32 %v276, 7
        %v278 = vlaneseq
        %v279 = vshrl.u32 %v278, 7
        %v280 = vsub.s32 0, %v279
        %v281 = vrot.slane %v227, %v280
        %v282 = vlaneseq
        %v283 = vshrl.u32 %v282, 7
        %v284 = vsub.s32 1, %v283
        %v285 = vrot.slane %v227, %v284
        %vm286 = vcmp.eq.s32.totalorder %v277, %v281
        %vm287 = vcmp.eq.s32.totalorder %v277, %v285
        %v288 = vsel %vm286, 1, 0
        %v289 = vsel %vm287, 1, 0
        %v290 = vcvt.s32.f32 %v288
        %v291 = vcvt.s32.f32 %v289
        %v294 = vcombine.low %v290, %v291
        %v296 = vmul.f32 %v226, %v294
        %v298 = vcombine.high %v296, %v296
        %v300 = vsel %vm231, %v296, 0.0
        %v301 = vrot.slane %v300, 4
        %v302 = vadd.f32 %v300, %v301
        %v303 = vrot.slane %v302, 2
        %v304 = vadd.f32 %v302, %v303
        %v305 = vrot.slane %v304, 1
        %v306 = vadd.f32 %v304, %v305
        %v307 = vsel %vm231, %v298, 0.0
        %v308 = vrot.slane %v307, 4
        %v309 = vadd.f32 %v307, %v308
        %v310 = vrot.slane %v309, 2
        %v311 = vadd.f32 %v309, %v310
        %v312 = vrot.slane %v311, 1
        %v313 = vadd.f32 %v311, %v312
        %v314 = vmul.f32 %v252, %v294
        %v316 = vcombine.high %v314, %v314
        %v318 = vsel %vm231, %v314, 0.0
        %v319 = vrot.slane %v318, 4
        %v320 = vadd.f32 %v318, %v319
        %v321 = vrot.slane %v320, 2
        %v322 = vadd.f32 %v320, %v321
        %v323 = vrot.slane %v322, 1
        %v324 = vadd.f32 %v322, %v323
        %v325 = vsel %vm231, %v316, 0.0
        %v326 = vrot.slane %v325, 4
        %v327 = vadd.f32 %v325, %v326
        %v328 = vrot.slane %v327, 2
        %v329 = vadd.f32 %v327, %v328
        %v330 = vrot.slane %v329, 1
        %v331 = vadd.f32 %v329, %v330
        %v332 = vsub.f32 %v274, %v306
        %v333 = vsub.f32 %v275, %v313
        %v334 = vrcp.pop %v262
        %v335 = vrcp.pop %v269
        %v336 = vmul.f32 %v324, %v334
        %v337 = vmul.f32 %v331, %v335
        %v338 = vsub.f32 1.0, %v336
        %v339 = vsub.f32 1.0, %v337
        %v340 = vmax.f32 %v338, 0.0
        %v341 = vmax.f32 %v339, 0.0
        %v342 = vmul.f32 %v340, %v340
        %v343 = vmul.f32 %v341, %v341
        %v344 = vmul.f32 %v342, %v332
        %v345 = vmul.f32 %v343, %v333
        %v346 = vadd.f32 %v344, %v345
        %347 = vadd.xlane.f32.xlu0 %v346
        %v348 = vpop.xlane.xlu0 %347
        %vm349 = vcmask 0
        %350 = vst.msk [vmem:[%s225] sm:$0x1] %vm349, %v348
        %p351 = scmp.lt.s32.totalorder %s23, 1
        %s352 = scalar_select %p351, %s23, 1
        %p353 = scmp.lt.s32.totalorder %s24, 0
        %s354 = scalar_select %p353, %s24, 0
        %s355 = sadd.s32 %s354, %s352
        %s356 = scalar_lea.vmem %s2, %s355
        // Predicated region
        $region37: #{tpu_custom_call.1} parent=27 // pred_check
          %p357 = pneg %p107
        $region38: #{tpu_custom_call.1} parent=27 // pred_check_branch
          %359 = sbr.rel (%p357) target = $region40
        $region39: #{tpu_custom_call.1} parent=27 // pred_region
          _
        $region40: #{tpu_custom_call.1} parent=27 // pred_fallthru
          _
      $region28: #{tpu_custom_call.1} parent=5 // pred_fallthru
        _
      %p360 = scmp.le.s32.totalorder 2, %s14
      // Predicated region
      $region41: #{tpu_custom_call.1} parent=5 // pred_check
        %p361 = pneg %p360
      $region42: #{tpu_custom_call.1} parent=5 // pred_check_branch
        %363 = sbr.rel (%p361) target = $region44
      $region43: #{tpu_custom_call.1} parent=5 // pred_region
        %s364 = ssub.s32 %s14, 2
        // Predicated region
        $region45: #{tpu_custom_call.1} parent=43 // pred_check
          %p365 = pneg %p113
        $region46: #{tpu_custom_call.1} parent=43 // pred_check_branch
          %367 = sbr.rel (%p365) target = $region48
        $region47: #{tpu_custom_call.1} parent=43 // pred_region
          %p368 = scmp.lt.s32.totalorder %s25, 1
          %s369 = scalar_select %p368, %s25, 1
          %p370 = scmp.lt.s32.totalorder %s26, 0
          %s371 = scalar_select %p370, %s26, 0
          %s372 = sadd.s32 %s371, %s369
          %s373 = scalar_lea.vmem %s2, %s372
        $region48: #{tpu_custom_call.1} parent=43 // pred_fallthru
          _
      $region44: #{tpu_custom_call.1} parent=5 // pred_fallthru
        _
    $region6: #{tpu_custom_call.1} parent=1 // loop_footer
      %s18 = sadd.s32 1, %s14
    $region7: #{tpu_custom_call.1} parent=1 // loop_footer_branch
      %13 = sbr.rel target = $region3
    $region8: #{tpu_custom_call.1} parent=1 // loop_exit
      _
    %374 = vsyncpa [#allocation3], 1
    %s375 = scalar_lea.sflag [#allocation3], 1
    %376 = vsyncpa %s375, 1
    %377 = vsyncpa [#allocation5], 1
    %s378 = scalar_lea.sflag [#allocation5], 1
    %379 = vsyncpa %s378, 1

</llo_original>
